<compile_context>
chip_gen: v5e
topology: v5e:2x2
jax: 0.10.0
libtpu: 0.0.40
codegen_flags: <defaults>
</compile_context>

<pallas_src>
import functools

import jax
import jax.numpy as jnp
from jax.experimental import pallas as pl
from jax.experimental.pallas import tpu as pltpu


# ----------------------------- Pallas kernel ------------------------------ #
def _mm_kernel(*refs, mode, relu):
    """out = [relu](W @ X [+ Wsc @ Xs | + R]), f32 accumulation on the MXU."""
    if mode == "shortcut":
        x_ref, w_ref, xs_ref, wsc_ref, o_ref = refs
    elif mode == "residual":
        x_ref, w_ref, r_ref, o_ref = refs
    else:  # "plain"
        x_ref, w_ref, o_ref = refs

    acc = jnp.dot(w_ref[...], x_ref[...], preferred_element_type=jnp.float32)
    if mode == "shortcut":
        acc = acc + jnp.dot(wsc_ref[...], xs_ref[...],
                            preferred_element_type=jnp.float32)
    elif mode == "residual":
        acc = acc + r_ref[...].astype(jnp.float32)
    if relu:
        acc = jnp.maximum(acc, 0.0)
    o_ref[...] = acc.astype(o_ref.dtype)


def _round_up(x, m):
    return ((x + m - 1) // m) * m


def _fused_matmul(x, w, *, xs=None, wsc=None, residual=None,
                  relu=False, out_dtype=jnp.float32):
    """out (N, M) = W (N, K) @ X (K, M)  [+ Wsc @ Xs | + residual], fused relu.

    M (the big dim) is the lane axis of the output -> lane-dense stores.
    """
    K, M = x.shape
    N = w.shape[0]
    assert w.shape[1] == K, (w.shape, x.shape)
    tm = min(512, _round_up(M, 128))
    mp = _round_up(M, tm)
    if mp != M:  # rare ragged tail; never hit at the shapes in __main__
        x = jnp.pad(x, ((0, 0), (0, mp - M)))
        if xs is not None:
            xs = jnp.pad(xs, ((0, 0), (0, mp - M)))
        if residual is not None:
            residual = jnp.pad(residual, ((0, 0), (0, mp - M)))

    in_specs = [pl.BlockSpec((K, tm), lambda i: (0, i)),
                pl.BlockSpec((N, K), lambda i: (0, 0))]
    args = [x, w]
    if xs is not None:
        ks = xs.shape[0]
        assert wsc.shape == (N, ks), (wsc.shape, xs.shape)
        in_specs += [pl.BlockSpec((ks, tm), lambda i: (0, i)),
                     pl.BlockSpec((N, ks), lambda i: (0, 0))]
        args += [xs, wsc]
        mode = "shortcut"
    elif residual is not None:
        in_specs += [pl.BlockSpec((N, tm), lambda i: (0, i))]
        args += [residual]
        mode = "residual"
    else:
        mode = "plain"

    out = pl.pallas_call(
        functools.partial(_mm_kernel, mode=mode, relu=relu),
        out_shape=jax.ShapeDtypeStruct((N, mp), out_dtype),
        grid=(mp // tm,),
        in_specs=in_specs,
        out_specs=pl.BlockSpec((N, tm), lambda i: (0, i)),
        compiler_params=pltpu.CompilerParams(dimension_semantics=("parallel",)),
    )(*args)
    return out[:, :M] if mp != M else out


# ------------------------------ conv helpers ------------------------------ #
def _im2col_cm(x, ksize, stride, pad):
    """Channel-major im2col: x (C,B,H,W) -> patches (Kp, B*Ho*Wo) bf16.

    Row layout: [kh*kw*C data rows | ones row (bias) | zero rows up to Kp],
    with Kp = round_up(k*k*C + 1, 8) so the sublane axis is 8-aligned.
    """
    C, B, H, W = x.shape
    xp = jnp.pad(x, ((0, 0), (0, 0), (pad, pad), (pad, pad)))
    Ho = (H + 2 * pad - ksize) // stride + 1
    Wo = (W + 2 * pad - ksize) // stride + 1
    M = B * Ho * Wo
    rows = []
    for kh in range(ksize):
        for kw in range(ksize):
            rows.append(
                xp[:, :, kh:kh + (Ho - 1) * stride + 1:stride,
                         kw:kw + (Wo - 1) * stride + 1:stride].reshape(C, M))
    rows.append(jnp.ones((1, M), x.dtype))  # bias row
    k_raw = ksize * ksize * C + 1
    k_pad = _round_up(k_raw, 8) - k_raw
    if k_pad:
        rows.append(jnp.zeros((k_pad, M), x.dtype))  # sublane alignment rows
    return jnp.concatenate(rows, axis=0), (Ho, Wo)


def _prep_conv_weight(w_oihw, bias):
    """(Cout,Cin,k,k)+(Cout,) -> bf16 (Cout, Kp) matching _im2col_cm row layout."""
    cout, cin, k, _ = w_oihw.shape
    w_row = jnp.transpose(w_oihw, (0, 2, 3, 1)).reshape(cout, k * k * cin)
    k_raw = k * k * cin + 1
    k_pad = _round_up(k_raw, 8) - k_raw
    cols = [w_row, bias[:, None]]
    if k_pad:
        cols.append(jnp.zeros((cout, k_pad), w_row.dtype))
    return jnp.concatenate(cols, axis=1).astype(jnp.bfloat16)


def resnet_block_cm(x, p):
    """x: (Cin, B, H, W) bf16 -> (Cout, B, Ho, Wo) bf16."""
    s = p["stride"]
    cin, B = x.shape[0], x.shape[1]
    patches1, (Ho, Wo) = _im2col_cm(x, 3, s, 1)
    h = _fused_matmul(patches1, p["w1_aug"], relu=True, out_dtype=jnp.bfloat16)
    h = h.reshape(p["cout"], B, Ho, Wo)
    patches2, _ = _im2col_cm(h, 3, 1, 1)
    m1 = B * Ho * Wo
    if p["wsc"] is not None:
        # conv2 + (1x1 strided shortcut conv) + add + relu, all in one kernel
        xs = x[:, :, ::s, ::s].reshape(cin, m1)
        cin_pad = p["wsc"].shape[1] - cin
        if cin_pad:
            xs = jnp.concatenate([xs, jnp.zeros((cin_pad, m1), xs.dtype)], axis=0)
        out = _fused_matmul(patches2, p["w2_aug"], xs=xs, wsc=p["wsc"],
                            relu=True, out_dtype=jnp.bfloat16)
    else:
        # identity shortcut: fused residual add
        out = _fused_matmul(patches2, p["w2_aug"], residual=x.reshape(cin, m1),
                            relu=True, out_dtype=jnp.bfloat16)
    return out.reshape(p["cout"], B, Ho, Wo)


def conv_transpose_cm(x, p, out_hw, relu):
    """ConvTranspose2d(D, Cout, 3, stride=s, padding=1) with output_size=out_hw.

    GEMM (no dilation / no im2col) + col2im scatter-add, bias + relu in XLA.
    """
    D, B, H, W = x.shape
    s, cout, pad = p["stride"], p["cout"], 1
    Hout, Wout = out_hw
    op_h = Hout - ((H - 1) * s - 2 * pad + 3)
    op_w = Wout - ((W - 1) * s - 2 * pad + 3)
    assert 0 <= op_h <= pad and 0 <= op_w <= pad, (op_h, op_w)

    M = B * H * W
    y = _fused_matmul(x.reshape(D, M).astype(jnp.bfloat16), p["wt"],
                      relu=False, out_dtype=jnp.float32)           # (9*Cout, M)
    y = y.reshape(3, 3, cout, B, H, W)

    Hext = (H - 1) * s + 3
    Wext = (W - 1) * s + 3
    out = jnp.zeros((cout, B, Hext, Wext), jnp.float32)
    for kh in range(3):
        for kw in range(3):
            out = out.at[:, :, kh:kh + (H - 1) * s + 1:s,
                               kw:kw + (W - 1) * s + 1:s].add(y[kh, kw])
    out = out[:, :, pad:pad + Hout, pad:pad + Wout] + p["b"][:, None, None, None]
    if relu:
        out = jnp.maximum(out, 0.0)
    return out


# --------------------------- parameters / model ---------------------------- #
def _uniform(key, shape, bound):
    return jax.random.uniform(key, shape, jnp.float32, -bound, bound)


def make_params(key, in_channel, channel_sizes, strides):
    cs = [in_channel] + list(channel_sizes)
    enc = []
    for cin, cout, s in zip(cs[:-1], cs[1:], strides):
        key, k1, k2, k3, k4, k5, k6 = jax.random.split(key, 7)
        b1 = 1.0 / float(cin * 9) ** 0.5
        w1, bias1 = _uniform(k1, (cout, cin, 3, 3), b1), _uniform(k2, (cout,), b1)
        b2 = 1.0 / float(cout * 9) ** 0.5
        w2, bias2 = _uniform(k3, (cout, cout, 3, 3), b2), _uniform(k4, (cout,), b2)
        if s != 1 or cin != cout:
            bs = 1.0 / float(cin) ** 0.5
            wsc, bsc = _uniform(k5, (cout, cin, 1, 1), bs), _uniform(k6, (cout,), bs)
            wsc_mat = wsc.reshape(cout, cin)
            cin_pad = _round_up(cin, 8) - cin          # sublane-align shortcut K
            if cin_pad:
                wsc_mat = jnp.concatenate(
                    [wsc_mat, jnp.zeros((cout, cin_pad), wsc_mat.dtype)], axis=1)
            wsc_mat = wsc_mat.astype(jnp.bfloat16)
            bias2 = bias2 + bsc          # fold shortcut bias into conv2 bias
        else:
            wsc_mat = None
        enc.append(dict(stride=s, cout=cout,
                        w1_aug=_prep_conv_weight(w1, bias1),
                        w2_aug=_prep_conv_weight(w2, bias2),
                        wsc=wsc_mat))
    dec = []
    for cin, cout, s in reversed(list(zip(cs[:-1], cs[1:], strides))):
        key, kw_, kb_ = jax.random.split(key, 3)
        bound = 1.0 / float(cin * 9) ** 0.5
        # ConvTranspose2d(in=cout, out=cin): torch weight (cout, cin, 3, 3), bias (cin,)
        W = _uniform(kw_, (cout, cin, 3, 3), bound)
        b = _uniform(kb_, (cin,), bound)
        wt = jnp.transpose(W, (2, 3, 1, 0)).reshape(9 * cin, cout).astype(jnp.bfloat16)
        dec.append(dict(stride=s, cout=cin, wt=wt, b=b))
    return enc, dec


def autoencoder_forward(x_nchw, enc_params, dec_params):
    x = jnp.transpose(x_nchw, (1, 0, 2, 3)).astype(jnp.bfloat16)  # NCHW -> (C,B,H,W)
    shapes = []
    for p in enc_params:
        shapes.append(x.shape)
        x = resnet_block_cm(x, p)
    n = len(shapes)
    h = x
    for idx, (p, shp) in enumerate(zip(dec_params, reversed(shapes))):
        h = conv_transpose_cm(h, p, (shp[2], shp[3]), relu=idx < n - 1)
    return jnp.transpose(h, (1, 0, 2, 3)).astype(jnp.float32)      # -> NCHW


# ---------------------------------- main ----------------------------------- #
if __name__ == "__main__":
    key = jax.random.PRNGKey(0)
    kx, kp = jax.random.split(key)
    B, C, H, W = 2, 4, 16, 16
    x = jax.random.normal(kx, (B, C, H, W), jnp.float32)
    # GenericAutoEncoder(in_channel=4, channel_sizes=[8, 16], strides=[2, 1])
    enc_p, dec_p = make_params(kp, C, [8, 16], [2, 1])
    fwd = jax.jit(lambda inp: autoencoder_forward(inp, enc_p, dec_p))
    out = jax.block_until_ready(fwd(x))
    assert out.shape == (B, C, H, W), out.shape
    assert bool(jnp.all(jnp.isfinite(out)))
    print("KERNEL_OK")
</pallas_src>

<mosaic_0001>
module attributes {stable_mosaic.version = 11 : i64} {
  func.func @_mm_kernel(%arg0: i32, %arg1: memref<40x128xbf16, #tpu.memory_space<vmem>>, %arg2: memref<8x40xbf16, #tpu.memory_space<vmem>>, %arg3: memref<8x128xbf16, #tpu.memory_space<vmem>>) attributes {dimension_semantics = [#tpu.dimension_semantics<parallel>], iteration_bounds = array<i64: 1>, scalar_prefetch = 0 : i64, scratch_operands = 0 : i64, tpu.core_type = #tpu.core_type<tc>, window_params = [{transform_indices = @transform_0, window_bounds = array<i64: 40, 128>}, {pipeline_mode = #tpu.pipeline_mode<synchronous>, transform_indices = @transform_1, window_bounds = array<i64: 8, 40>}, {transform_indices = @transform_2, window_bounds = array<i64: 8, 128>}]} {
    %c0 = arith.constant 0 : index
    %c0_0 = arith.constant 0 : index
    %0 = vector.load %arg2[%c0, %c0_0] : memref<8x40xbf16, #tpu.memory_space<vmem>>, vector<8x40xbf16>
    %c0_1 = arith.constant 0 : index
    %c0_2 = arith.constant 0 : index
    %1 = vector.load %arg1[%c0_1, %c0_2] : memref<40x128xbf16, #tpu.memory_space<vmem>>, vector<40x128xbf16>
    %cst = arith.constant dense<0.000000e+00> : vector<8x128xf32>
    %2 = tpu.matmul %0, %1, %cst {dimension_numbers = #tpu.dot_dimension_numbers<[1], [0], [0], [1], [0, 0, 1, 1], [], []>} : vector<8x40xbf16>, vector<40x128xbf16>, vector<8x128xf32> -> vector<8x128xf32>
    %cst_3 = arith.constant 0.000000e+00 : f32
    %3 = vector.broadcast %cst_3 : f32 to vector<8x128xf32>
    %4 = arith.maximumf %2, %3 : vector<8x128xf32>
    %5 = arith.truncf %4 : vector<8x128xf32> to vector<8x128xbf16>
    %c0_4 = arith.constant 0 : index
    %c0_5 = arith.constant 0 : index
    %6 = vector.load %arg3[%c0_4, %c0_5] : memref<8x128xbf16, #tpu.memory_space<vmem>>, vector<8x128xbf16>
    tpu.vector_store %arg3[%c0_4, %c0_5], %5 {strides = array<i32>} : memref<8x128xbf16, #tpu.memory_space<vmem>>, vector<8x128xbf16>,
    return
  }
  func.func @transform_0(%arg0: i32) -> (i32, i32) {
    %c0_i32 = arith.constant 0 : i32
    %c0_i32_0 = arith.constant 0 : i32
    return %c0_i32, %arg0 : i32, i32
  }
  func.func @transform_1(%arg0: i32) -> (i32, i32) {
    %c0_i32 = arith.constant 0 : i32
    %c0_i32_0 = arith.constant 0 : i32
    %c0_i32_1 = arith.constant 0 : i32
    return %c0_i32, %c0_i32_0 : i32, i32
  }
  func.func @transform_2(%arg0: i32) -> (i32, i32) {
    %c0_i32 = arith.constant 0 : i32
    %c0_i32_0 = arith.constant 0 : i32
    return %c0_i32, %arg0 : i32, i32
  }
}

module attributes {stable_mosaic.version = 11 : i64} {
  func.func @_mm_kernel(%arg0: i32, %arg1: memref<80x128xbf16, #tpu.memory_space<vmem>>, %arg2: memref<16x80xbf16, #tpu.memory_space<vmem>>, %arg3: memref<16x128xbf16, #tpu.memory_space<vmem>>) attributes {dimension_semantics = [#tpu.dimension_semantics<parallel>], iteration_bounds = array<i64: 1>, scalar_prefetch = 0 : i64, scratch_operands = 0 : i64, tpu.core_type = #tpu.core_type<tc>, window_params = [{transform_indices = @transform_0, window_bounds = array<i64: 80, 128>}, {pipeline_mode = #tpu.pipeline_mode<synchronous>, transform_indices = @transform_1, window_bounds = array<i64: 16, 80>}, {transform_indices = @transform_2, window_bounds = array<i64: 16, 128>}]} {
    %c0 = arith.constant 0 : index
    %c0_0 = arith.constant 0 : index
    %0 = vector.load %arg2[%c0, %c0_0] : memref<16x80xbf16, #tpu.memory_space<vmem>>, vector<16x80xbf16>
    %c0_1 = arith.constant 0 : index
    %c0_2 = arith.constant 0 : index
    %1 = vector.load %arg1[%c0_1, %c0_2] : memref<80x128xbf16, #tpu.memory_space<vmem>>, vector<80x128xbf16>
    %cst = arith.constant dense<0.000000e+00> : vector<16x128xf32>
    %2 = tpu.matmul %0, %1, %cst {dimension_numbers = #tpu.dot_dimension_numbers<[1], [0], [0], [1], [0, 0, 1, 1], [], []>} : vector<16x80xbf16>, vector<80x128xbf16>, vector<16x128xf32> -> vector<16x128xf32>
    %cst_3 = arith.constant 0.000000e+00 : f32
    %3 = vector.broadcast %cst_3 : f32 to vector<16x128xf32>
    %4 = arith.maximumf %2, %3 : vector<16x128xf32>
    %5 = arith.truncf %4 : vector<16x128xf32> to vector<16x128xbf16>
    %c0_4 = arith.constant 0 : index
    %c0_5 = arith.constant 0 : index
    %6 = vector.load %arg3[%c0_4, %c0_5] : memref<16x128xbf16, #tpu.memory_space<vmem>>, vector<16x128xbf16>
    tpu.vector_store %arg3[%c0_4, %c0_5], %5 {strides = array<i32>} : memref<16x128xbf16, #tpu.memory_space<vmem>>, vector<16x128xbf16>,
    return
  }
  func.func @transform_0(%arg0: i32) -> (i32, i32) {
    %c0_i32 = arith.constant 0 : i32
    %c0_i32_0 = arith.constant 0 : i32
    return %c0_i32, %arg0 : i32, i32
  }
  func.func @transform_1(%arg0: i32) -> (i32, i32) {
    %c0_i32 = arith.constant 0 : i32
    %c0_i32_0 = arith.constant 0 : i32
    %c0_i32_1 = arith.constant 0 : i32
    return %c0_i32, %c0_i32_0 : i32, i32
  }
  func.func @transform_2(%arg0: i32) -> (i32, i32) {
    %c0_i32 = arith.constant 0 : i32
    %c0_i32_0 = arith.constant 0 : i32
    return %c0_i32, %arg0 : i32, i32
  }
}

module attributes {stable_mosaic.version = 11 : i64} {
  func.func @_mm_kernel(%arg0: i32, %arg1: memref<80x128xbf16, #tpu.memory_space<vmem>>, %arg2: memref<8x80xbf16, #tpu.memory_space<vmem>>, %arg3: memref<8x128xbf16, #tpu.memory_space<vmem>>, %arg4: memref<8x8xbf16, #tpu.memory_space<vmem>>, %arg5: memref<8x128xbf16, #tpu.memory_space<vmem>>) attributes {dimension_semantics = [#tpu.dimension_semantics<parallel>], iteration_bounds = array<i64: 1>, scalar_prefetch = 0 : i64, scratch_operands = 0 : i64, tpu.core_type = #tpu.core_type<tc>, window_params = [{transform_indices = @transform_0, window_bounds = array<i64: 80, 128>}, {pipeline_mode = #tpu.pipeline_mode<synchronous>, transform_indices = @transform_1, window_bounds = array<i64: 8, 80>}, {transform_indices = @transform_2, window_bounds = array<i64: 8, 128>}, {pipeline_mode = #tpu.pipeline_mode<synchronous>, transform_indices = @transform_3, window_bounds = array<i64: 8, 8>}, {transform_indices = @transform_4, window_bounds = array<i64: 8, 128>}]} {
    %c0 = arith.constant 0 : index
    %c0_0 = arith.constant 0 : index
    %0 = vector.load %arg2[%c0, %c0_0] : memref<8x80xbf16, #tpu.memory_space<vmem>>, vector<8x80xbf16>
    %c0_1 = arith.constant 0 : index
    %c0_2 = arith.constant 0 : index
    %1 = vector.load %arg1[%c0_1, %c0_2] : memref<80x128xbf16, #tpu.memory_space<vmem>>, vector<80x128xbf16>
    %cst = arith.constant dense<0.000000e+00> : vector<8x128xf32>
    %2 = tpu.matmul %0, %1, %cst {dimension_numbers = #tpu.dot_dimension_numbers<[1], [0], [0], [1], [0, 0, 1, 1], [], []>} : vector<8x80xbf16>, vector<80x128xbf16>, vector<8x128xf32> -> vector<8x128xf32>
    %c0_3 = arith.constant 0 : index
    %c0_4 = arith.constant 0 : index
    %3 = vector.load %arg4[%c0_3, %c0_4] : memref<8x8xbf16, #tpu.memory_space<vmem>>, vector<8x8xbf16>
    %c0_5 = arith.constant 0 : index
    %c0_6 = arith.constant 0 : index
    %4 = vector.load %arg3[%c0_5, %c0_6] : memref<8x128xbf16, #tpu.memory_space<vmem>>, vector<8x128xbf16>
    %cst_7 = arith.constant dense<0.000000e+00> : vector<8x128xf32>
    %5 = tpu.matmul %3, %4, %cst_7 {dimension_numbers = #tpu.dot_dimension_numbers<[1], [0], [0], [1], [0, 0, 1, 1], [], []>} : vector<8x8xbf16>, vector<8x128xbf16>, vector<8x128xf32> -> vector<8x128xf32>
    %6 = arith.addf %2, %5 : vector<8x128xf32>
    %cst_8 = arith.constant 0.000000e+00 : f32
    %7 = vector.broadcast %cst_8 : f32 to vector<8x128xf32>
    %8 = arith.maximumf %6, %7 : vector<8x128xf32>
    %9 = arith.truncf %8 : vector<8x128xf32> to vector<8x128xbf16>
    %c0_9 = arith.constant 0 : index
    %c0_10 = arith.constant 0 : index
    %10 = vector.load %arg5[%c0_9, %c0_10] : memref<8x128xbf16, #tpu.memory_space<vmem>>, vector<8x128xbf16>
    tpu.vector_store %arg5[%c0_9, %c0_10], %9 {strides = array<i32>} : memref<8x128xbf16, #tpu.memory_space<vmem>>, vector<8x128xbf16>,
    return
  }
  func.func @transform_0(%arg0: i32) -> (i32, i32) {
    %c0_i32 = arith.constant 0 : i32
    %c0_i32_0 = arith.constant 0 : i32
    return %c0_i32, %arg0 : i32, i32
  }
  func.func @transform_1(%arg0: i32) -> (i32, i32) {
    %c0_i32 = arith.constant 0 : i32
    %c0_i32_0 = arith.constant 0 : i32
    %c0_i32_1 = arith.constant 0 : i32
    return %c0_i32, %c0_i32_0 : i32, i32
  }
  func.func @transform_2(%arg0: i32) -> (i32, i32) {
    %c0_i32 = arith.constant 0 : i32
    %c0_i32_0 = arith.constant 0 : i32
    return %c0_i32, %arg0 : i32, i32
  }
  func.func @transform_3(%arg0: i32) -> (i32, i32) {
    %c0_i32 = arith.constant 0 : i32
    %c0_i32_0 = arith.constant 0 : i32
    %c0_i32_1 = arith.constant 0 : i32
    return %c0_i32, %c0_i32_0 : i32, i32
  }
  func.func @transform_4(%arg0: i32) -> (i32, i32) {
    %c0_i32 = arith.constant 0 : i32
    %c0_i32_0 = arith.constant 0 : i32
    return %c0_i32, %arg0 : i32, i32
  }
}

module attributes {stable_mosaic.version = 11 : i64} {
  func.func @_mm_kernel(%arg0: i32, %arg1: memref<152x128xbf16, #tpu.memory_space<vmem>>, %arg2: memref<16x152xbf16, #tpu.memory_space<vmem>>, %arg3: memref<8x128xbf16, #tpu.memory_space<vmem>>, %arg4: memref<16x8xbf16, #tpu.memory_space<vmem>>, %arg5: memref<16x128xbf16, #tpu.memory_space<vmem>>) attributes {dimension_semantics = [#tpu.dimension_semantics<parallel>], iteration_bounds = array<i64: 1>, scalar_prefetch = 0 : i64, scratch_operands = 0 : i64, tpu.core_type = #tpu.core_type<tc>, window_params = [{transform_indices = @transform_0, window_bounds = array<i64: 152, 128>}, {pipeline_mode = #tpu.pipeline_mode<synchronous>, transform_indices = @transform_1, window_bounds = array<i64: 16, 152>}, {transform_indices = @transform_2, window_bounds = array<i64: 8, 128>}, {pipeline_mode = #tpu.pipeline_mode<synchronous>, transform_indices = @transform_3, window_bounds = array<i64: 16, 8>}, {transform_indices = @transform_4, window_bounds = array<i64: 16, 128>}]} {
    %c0 = arith.constant 0 : index
    %c0_0 = arith.constant 0 : index
    %0 = vector.load %arg2[%c0, %c0_0] : memref<16x152xbf16, #tpu.memory_space<vmem>>, vector<16x152xbf16>
    %c0_1 = arith.constant 0 : index
    %c0_2 = arith.constant 0 : index
    %1 = vector.load %arg1[%c0_1, %c0_2] : memref<152x128xbf16, #tpu.memory_space<vmem>>, vector<152x128xbf16>
    %cst = arith.constant dense<0.000000e+00> : vector<16x128xf32>
    %2 = tpu.matmul %0, %1, %cst {dimension_numbers = #tpu.dot_dimension_numbers<[1], [0], [0], [1], [0, 0, 1, 1], [], []>} : vector<16x152xbf16>, vector<152x128xbf16>, vector<16x128xf32> -> vector<16x128xf32>
    %c0_3 = arith.constant 0 : index
    %c0_4 = arith.constant 0 : index
    %3 = vector.load %arg4[%c0_3, %c0_4] : memref<16x8xbf16, #tpu.memory_space<vmem>>, vector<16x8xbf16>
    %c0_5 = arith.constant 0 : index
    %c0_6 = arith.constant 0 : index
    %4 = vector.load %arg3[%c0_5, %c0_6] : memref<8x128xbf16, #tpu.memory_space<vmem>>, vector<8x128xbf16>
    %cst_7 = arith.constant dense<0.000000e+00> : vector<16x128xf32>
    %5 = tpu.matmul %3, %4, %cst_7 {dimension_numbers = #tpu.dot_dimension_numbers<[1], [0], [0], [1], [0, 0, 1, 1], [], []>} : vector<16x8xbf16>, vector<8x128xbf16>, vector<16x128xf32> -> vector<16x128xf32>
    %6 = arith.addf %2, %5 : vector<16x128xf32>
    %cst_8 = arith.constant 0.000000e+00 : f32
    %7 = vector.broadcast %cst_8 : f32 to vector<16x128xf32>
    %8 = arith.maximumf %6, %7 : vector<16x128xf32>
    %9 = arith.truncf %8 : vector<16x128xf32> to vector<16x128xbf16>
    %c0_9 = arith.constant 0 : index
    %c0_10 = arith.constant 0 : index
    %10 = vector.load %arg5[%c0_9, %c0_10] : memref<16x128xbf16, #tpu.memory_space<vmem>>, vector<16x128xbf16>
    tpu.vector_store %arg5[%c0_9, %c0_10], %9 {strides = array<i32>} : memref<16x128xbf16, #tpu.memory_space<vmem>>, vector<16x128xbf16>,
    return
  }
  func.func @transform_0(%arg0: i32) -> (i32, i32) {
    %c0_i32 = arith.constant 0 : i32
    %c0_i32_0 = arith.constant 0 : i32
    return %c0_i32, %arg0 : i32, i32
  }
  func.func @transform_1(%arg0: i32) -> (i32, i32) {
    %c0_i32 = arith.constant 0 : i32
    %c0_i32_0 = arith.constant 0 : i32
    %c0_i32_1 = arith.constant 0 : i32
    return %c0_i32, %c0_i32_0 : i32, i32
  }
  func.func @transform_2(%arg0: i32) -> (i32, i32) {
    %c0_i32 = arith.constant 0 : i32
    %c0_i32_0 = arith.constant 0 : i32
    return %c0_i32, %arg0 : i32, i32
  }
  func.func @transform_3(%arg0: i32) -> (i32, i32) {
    %c0_i32 = arith.constant 0 : i32
    %c0_i32_0 = arith.constant 0 : i32
    %c0_i32_1 = arith.constant 0 : i32
    return %c0_i32, %c0_i32_0 : i32, i32
  }
  func.func @transform_4(%arg0: i32) -> (i32, i32) {
    %c0_i32 = arith.constant 0 : i32
    %c0_i32_0 = arith.constant 0 : i32
    return %c0_i32, %arg0 : i32, i32
  }
}

module attributes {stable_mosaic.version = 11 : i64} {
  func.func @_mm_kernel(%arg0: i32, %arg1: memref<16x128xbf16, #tpu.memory_space<vmem>>, %arg2: memref<72x16xbf16, #tpu.memory_space<vmem>>, %arg3: memref<72x128xf32, #tpu.memory_space<vmem>>) attributes {dimension_semantics = [#tpu.dimension_semantics<parallel>], iteration_bounds = array<i64: 1>, scalar_prefetch = 0 : i64, scratch_operands = 0 : i64, tpu.core_type = #tpu.core_type<tc>, window_params = [{transform_indices = @transform_0, window_bounds = array<i64: 16, 128>}, {pipeline_mode = #tpu.pipeline_mode<synchronous>, transform_indices = @transform_1, window_bounds = array<i64: 72, 16>}, {transform_indices = @transform_2, window_bounds = array<i64: 72, 128>}]} {
    %c0 = arith.constant 0 : index
    %c0_0 = arith.constant 0 : index
    %0 = vector.load %arg2[%c0, %c0_0] : memref<72x16xbf16, #tpu.memory_space<vmem>>, vector<72x16xbf16>
    %c0_1 = arith.constant 0 : index
    %c0_2 = arith.constant 0 : index
    %1 = vector.load %arg1[%c0_1, %c0_2] : memref<16x128xbf16, #tpu.memory_space<vmem>>, vector<16x128xbf16>
    %cst = arith.constant dense<0.000000e+00> : vector<72x128xf32>
    %2 = tpu.matmul %0, %1, %cst {dimension_numbers = #tpu.dot_dimension_numbers<[1], [0], [0], [1], [0, 0, 1, 1], [], []>} : vector<72x16xbf16>, vector<16x128xbf16>, vector<72x128xf32> -> vector<72x128xf32>
    %c0_3 = arith.constant 0 : index
    %c0_4 = arith.constant 0 : index
    %3 = vector.load %arg3[%c0_3, %c0_4] : memref<72x128xf32, #tpu.memory_space<vmem>>, vector<72x128xf32>
    tpu.vector_store %arg3[%c0_3, %c0_4], %2 {strides = array<i32>} : memref<72x128xf32, #tpu.memory_space<vmem>>, vector<72x128xf32>,
    return
  }
  func.func @transform_0(%arg0: i32) -> (i32, i32) {
    %c0_i32 = arith.constant 0 : i32
    %c0_i32_0 = arith.constant 0 : i32
    return %c0_i32, %arg0 : i32, i32
  }
  func.func @transform_1(%arg0: i32) -> (i32, i32) {
    %c0_i32 = arith.constant 0 : i32
    %c0_i32_0 = arith.constant 0 : i32
    %c0_i32_1 = arith.constant 0 : i32
    return %c0_i32, %c0_i32_0 : i32, i32
  }
  func.func @transform_2(%arg0: i32) -> (i32, i32) {
    %c0_i32 = arith.constant 0 : i32
    %c0_i32_0 = arith.constant 0 : i32
    return %c0_i32, %arg0 : i32, i32
  }
}

module attributes {stable_mosaic.version = 11 : i64} {
  func.func @_mm_kernel(%arg0: i32, %arg1: memref<8x128xbf16, #tpu.memory_space<vmem>>, %arg2: memref<36x8xbf16, #tpu.memory_space<vmem>>, %arg3: memref<36x128xf32, #tpu.memory_space<vmem>>) attributes {dimension_semantics = [#tpu.dimension_semantics<parallel>], iteration_bounds = array<i64: 1>, scalar_prefetch = 0 : i64, scratch_operands = 0 : i64, tpu.core_type = #tpu.core_type<tc>, window_params = [{transform_indices = @transform_0, window_bounds = array<i64: 8, 128>}, {pipeline_mode = #tpu.pipeline_mode<synchronous>, transform_indices = @transform_1, window_bounds = array<i64: 36, 8>}, {transform_indices = @transform_2, window_bounds = array<i64: 36, 128>}]} {
    %c0 = arith.constant 0 : index
    %c0_0 = arith.constant 0 : index
    %0 = vector.load %arg2[%c0, %c0_0] : memref<36x8xbf16, #tpu.memory_space<vmem>>, vector<36x8xbf16>
    %c0_1 = arith.constant 0 : index
    %c0_2 = arith.constant 0 : index
    %1 = vector.load %arg1[%c0_1, %c0_2] : memref<8x128xbf16, #tpu.memory_space<vmem>>, vector<8x128xbf16>
    %cst = arith.constant dense<0.000000e+00> : vector<36x128xf32>
    %2 = tpu.matmul %0, %1, %cst {dimension_numbers = #tpu.dot_dimension_numbers<[1], [0], [0], [1], [0, 0, 1, 1], [], []>} : vector<36x8xbf16>, vector<8x128xbf16>, vector<36x128xf32> -> vector<36x128xf32>
    %c0_3 = arith.constant 0 : index
    %c0_4 = arith.constant 0 : index
    %3 = vector.load %arg3[%c0_3, %c0_4] : memref<36x128xf32, #tpu.memory_space<vmem>>, vector<36x128xf32>
    tpu.vector_store %arg3[%c0_3, %c0_4], %2 {strides = array<i32>} : memref<36x128xf32, #tpu.memory_space<vmem>>, vector<36x128xf32>,
    return
  }
  func.func @transform_0(%arg0: i32) -> (i32, i32) {
    %c0_i32 = arith.constant 0 : i32
    %c0_i32_0 = arith.constant 0 : i32
    return %c0_i32, %arg0 : i32, i32
  }
  func.func @transform_1(%arg0: i32) -> (i32, i32) {
    %c0_i32 = arith.constant 0 : i32
    %c0_i32_0 = arith.constant 0 : i32
    %c0_i32_1 = arith.constant 0 : i32
    return %c0_i32, %c0_i32_0 : i32, i32
  }
  func.func @transform_2(%arg0: i32) -> (i32, i32) {
    %c0_i32 = arith.constant 0 : i32
    %c0_i32_0 = arith.constant 0 : i32
    return %c0_i32, %arg0 : i32, i32
  }
}

</mosaic_0001>

<llo_original>
// kernel: _lambda_.6
$region0: #{_lambda_.6}
  #allocation0 [shape = 'u32[]', space=smem, size = 0x4, offset = 0x4, fixed_abs, tag = 'smem constant byte address 0x4 - core index']
  #allocation1 [shape = 'u32[72,128]{1,0:T(1,128)}', space=vmem, size = 0x9000, scoped, tag = 'internal scratch']
  %s0 = inlined_call_operand.vmem [shape: bf16[40,128], index: 0, kind: input, shape index: {}]
  %s1 = inlined_call_operand.vmem [shape: bf16[8,40], index: 1, kind: input, shape index: {}]
  %s2 = inlined_call_operand.vmem [shape: bf16[8,128], index: 2, kind: output, shape index: {}]
  %s3 = sld [smem:[#allocation0]]
  $region18: #{_lambda_.6} parent=0
    _
  %s5 = ssub.s32 1, %s3
  %s6 = scalar_select 0, %s5, %s3
  // Predicated region
  $region2: #{_lambda_.6} parent=0 // pred_check
    _
  $region3: #{_lambda_.6} parent=0 // pred_check_branch
    %8 = sbr.rel (0) target = $region5
  $region4: #{_lambda_.6} parent=0 // pred_region
    _
  $region5: #{_lambda_.6} parent=0 // pred_fallthru
    _
  // Predicated region
  $region6: #{_lambda_.6} parent=0 // pred_check
    _
  $region7: #{_lambda_.6} parent=0 // pred_check_branch
    %10 = sbr.rel (0) target = $region9
  $region8: #{_lambda_.6} parent=0 // pred_region
    _
  $region9: #{_lambda_.6} parent=0 // pred_fallthru
    _
  %v12 = vld [vmem:[%s1] sm:$0xf]
  %v13 = vld [vmem:[%s0] sm:$0xf]
  %v14 = vld [vmem:[%s0 + $0x4] sm:$0xf]
  %v15 = vld [vmem:[%s0 + $0x8] sm:$0xf]
  %v16 = vld [vmem:[%s0 + $0xc] sm:$0xf]
  %v17 = vld [vmem:[%s0 + $0x10] sm:$0xf]
  %v23 = vunpack.c.l.b16 %v13
  %v24 = vunpack.c.l.b16 %v14
  %v25 = vunpack.c.l.b16 %v15
  %v26 = vunpack.c.l.b16 %v16
  %v27 = vunpack.c.l.b16 %v17
  %v28 = vpack.c.b16 %v24, %v23
  %v29 = vpack.c.b16 %v26, %v25
  %v30 = vpack.c.b16 %v27, %v27
  %vm33 = vcmask 326656
  %v35 = vsel %vm33, %v12, 0
  %vm37 = vcmask 1043456
  %v39 = vsel %vm37, %v30, 0
  %41 = vmatpush.bf16.msra.mxu0 0
  %42 = vmatpush.bf16.msra.mxu0 0
  %43 = vmatpush.bf16.msra.mxu0 0
  %44 = vmatpush.bf16.msra.mxu0 0
  %45 = vmatpush.bf16.msra.mxu0 0
  %46 = vmatpush.bf16.msra.mxu0 %v39
  %47 = vmatpush.bf16.msra.mxu0 %v29
  %48 = vmatpush.bf16.msra.mxu0 %v28
  %49 = vmatmul.bf16.gmra.mxu0 %v35
  %v50 = vpop.f32.mrf.mxu0
  %v51 = vadd.f32 0.0, %v50
  %v52 = vpop.f32.mrf.mxu0
  %53 = vdwg.mxu0
  %v54 = vmax.f32 %v51, 0.0
  %v55 = vpack.c.bf16 %v54, %v54
  %56 = vst [vmem:[%s2] sm:$0xf] %v55
  // Predicated region
  $region10: #{_lambda_.6} parent=0 // pred_check
    _
  $region11: #{_lambda_.6} parent=0 // pred_check_branch
    %58 = sbr.rel (0) target = $region13
  $region12: #{_lambda_.6} parent=0 // pred_region
    _
  $region13: #{_lambda_.6} parent=0 // pred_fallthru
    _
  // Predicated region
  $region14: #{_lambda_.6} parent=0 // pred_check
    _
  $region15: #{_lambda_.6} parent=0 // pred_check_branch
    %60 = sbr.rel (0) target = $region17
  $region16: #{_lambda_.6} parent=0 // pred_region
    _
  $region17: #{_lambda_.6} parent=0 // pred_fallthru
    _

// kernel: _lambda_.8
$region0: #{_lambda_.8}
  #allocation0 [shape = 'u32[]', space=smem, size = 0x4, offset = 0x4, fixed_abs, tag = 'smem constant byte address 0x4 - core index']
  #allocation1 [shape = 'u32[72,128]{1,0:T(1,128)}', space=vmem, size = 0x9000, scoped, tag = 'internal scratch']
  %s0 = inlined_call_operand.vmem [shape: bf16[80,128], index: 0, kind: input, shape index: {}]
  %s1 = inlined_call_operand.vmem [shape: bf16[16,80], index: 1, kind: input, shape index: {}]
  %s2 = inlined_call_operand.vmem [shape: bf16[16,128], index: 2, kind: output, shape index: {}]
  %s3 = sld [smem:[#allocation0]]
  $region18: #{_lambda_.8} parent=0
    _
  %s5 = ssub.s32 1, %s3
  %s6 = scalar_select 0, %s5, %s3
  // Predicated region
  $region2: #{_lambda_.8} parent=0 // pred_check
    _
  $region3: #{_lambda_.8} parent=0 // pred_check_branch
    %8 = sbr.rel (0) target = $region5
  $region4: #{_lambda_.8} parent=0 // pred_region
    _
  $region5: #{_lambda_.8} parent=0 // pred_fallthru
    _
  // Predicated region
  $region6: #{_lambda_.8} parent=0 // pred_check
    _
  $region7: #{_lambda_.8} parent=0 // pred_check_branch
    %10 = sbr.rel (0) target = $region9
  $region8: #{_lambda_.8} parent=0 // pred_region
    _
  $region9: #{_lambda_.8} parent=0 // pred_fallthru
    _
  %v12 = vld [vmem:[%s1] sm:$0xf]
  %v13 = vld [vmem:[%s1 + $0x4] sm:$0xf]
  %v14 = vld [vmem:[%s0] sm:$0xf]
  %v15 = vld [vmem:[%s0 + $0x4] sm:$0xf]
  %v16 = vld [vmem:[%s0 + $0x8] sm:$0xf]
  %v17 = vld [vmem:[%s0 + $0xc] sm:$0xf]
  %v18 = vld [vmem:[%s0 + $0x10] sm:$0xf]
  %v19 = vld [vmem:[%s0 + $0x14] sm:$0xf]
  %v20 = vld [vmem:[%s0 + $0x18] sm:$0xf]
  %v21 = vld [vmem:[%s0 + $0x1c] sm:$0xf]
  %v22 = vld [vmem:[%s0 + $0x20] sm:$0xf]
  %v23 = vld [vmem:[%s0 + $0x24] sm:$0xf]
  %v26 = vunpack.c.l.b16 %v12
  %v27 = vunpack.c.l.b16 %v13
  %v28 = vpack.c.b16 %v27, %v26
  %v39 = vunpack.c.l.b16 %v14
  %v40 = vunpack.c.l.b16 %v15
  %v41 = vunpack.c.l.b16 %v16
  %v42 = vunpack.c.l.b16 %v17
  %v43 = vunpack.c.l.b16 %v18
  %v44 = vunpack.c.l.b16 %v19
  %v45 = vunpack.c.l.b16 %v20
  %v46 = vunpack.c.l.b16 %v21
  %v47 = vunpack.c.l.b16 %v22
  %v48 = vunpack.c.l.b16 %v23
  %v49 = vpack.c.b16 %v40, %v39
  %v50 = vpack.c.b16 %v42, %v41
  %v51 = vpack.c.b16 %v44, %v43
  %v52 = vpack.c.b16 %v46, %v45
  %v53 = vpack.c.b16 %v48, %v47
  %vm59 = vcmask 654336
  %v61 = vsel %vm59, %v28, 0
  %63 = vmatpush.bf16.msra.mxu0 0
  %64 = vmatpush.bf16.msra.mxu0 0
  %65 = vmatpush.bf16.msra.mxu0 0
  %66 = vmatpush.bf16.msra.mxu0 %v53
  %67 = vmatpush.bf16.msra.mxu0 %v52
  %68 = vmatpush.bf16.msra.mxu0 %v51
  %69 = vmatpush.bf16.msra.mxu0 %v50
  %70 = vmatpush.bf16.msra.mxu0 %v49
  %71 = vmatmul.bf16.gmra.mxu0 %v61
  %v72 = vpop.f32.mrf.mxu0
  %v73 = vadd.f32 0.0, %v72
  %v74 = vpop.f32.mrf.mxu0
  %v75 = vadd.f32 0.0, %v74
  %76 = vdwg.mxu0
  %v77 = vmax.f32 %v73, 0.0
  %v78 = vmax.f32 %v75, 0.0
  %v79 = vpack.c.bf16 %v77, %v77
  %v80 = vpack.c.bf16 %v78, %v78
  %81 = vst [vmem:[%s2] sm:$0xf] %v79
  %82 = vst [vmem:[%s2 + $0x4] sm:$0xf] %v80
  // Predicated region
  $region10: #{_lambda_.8} parent=0 // pred_check
    _
  $region11: #{_lambda_.8} parent=0 // pred_check_branch
    %84 = sbr.rel (0) target = $region13
  $region12: #{_lambda_.8} parent=0 // pred_region
    _
  $region13: #{_lambda_.8} parent=0 // pred_fallthru
    _
  // Predicated region
  $region14: #{_lambda_.8} parent=0 // pred_check
    _
  $region15: #{_lambda_.8} parent=0 // pred_check_branch
    %86 = sbr.rel (0) target = $region17
  $region16: #{_lambda_.8} parent=0 // pred_region
    _
  $region17: #{_lambda_.8} parent=0 // pred_fallthru
    _

// kernel: _lambda_.7
$region0: #{_lambda_.7}
  #allocation0 [shape = 'u32[]', space=smem, size = 0x4, offset = 0x4, fixed_abs, tag = 'smem constant byte address 0x4 - core index']
  #allocation1 [shape = 'u32[72,128]{1,0:T(1,128)}', space=vmem, size = 0x9000, scoped, tag = 'internal scratch']
  %s0 = inlined_call_operand.vmem [shape: bf16[80,128], index: 0, kind: input, shape index: {}]
  %s1 = inlined_call_operand.vmem [shape: bf16[8,80], index: 1, kind: input, shape index: {}]
  %s2 = inlined_call_operand.vmem [shape: bf16[8,128], index: 2, kind: input, shape index: {}]
  %s3 = inlined_call_operand.vmem [shape: bf16[8,8], index: 3, kind: input, shape index: {}]
  %s4 = inlined_call_operand.vmem [shape: bf16[8,128], index: 4, kind: output, shape index: {}]
  %s5 = sld [smem:[#allocation0]]
  $region26: #{_lambda_.7} parent=0
    _
  %s7 = ssub.s32 1, %s5
  %s8 = scalar_select 0, %s7, %s5
  // Predicated region
  $region2: #{_lambda_.7} parent=0 // pred_check
    _
  $region3: #{_lambda_.7} parent=0 // pred_check_branch
    %10 = sbr.rel (0) target = $region5
  $region4: #{_lambda_.7} parent=0 // pred_region
    _
  $region5: #{_lambda_.7} parent=0 // pred_fallthru
    _
  // Predicated region
  $region6: #{_lambda_.7} parent=0 // pred_check
    _
  $region7: #{_lambda_.7} parent=0 // pred_check_branch
    %12 = sbr.rel (0) target = $region9
  $region8: #{_lambda_.7} parent=0 // pred_region
    _
  $region9: #{_lambda_.7} parent=0 // pred_fallthru
    _
  // Predicated region
  $region10: #{_lambda_.7} parent=0 // pred_check
    _
  $region11: #{_lambda_.7} parent=0 // pred_check_branch
    %14 = sbr.rel (0) target = $region13
  $region12: #{_lambda_.7} parent=0 // pred_region
    _
  $region13: #{_lambda_.7} parent=0 // pred_fallthru
    _
  // Predicated region
  $region14: #{_lambda_.7} parent=0 // pred_check
    _
  $region15: #{_lambda_.7} parent=0 // pred_check_branch
    %16 = sbr.rel (0) target = $region17
  $region16: #{_lambda_.7} parent=0 // pred_region
    _
  $region17: #{_lambda_.7} parent=0 // pred_fallthru
    _
  %v18 = vld [vmem:[%s1] sm:$0xf]
  %v19 = vld [vmem:[%s0] sm:$0xf]
  %v20 = vld [vmem:[%s0 + $0x4] sm:$0xf]
  %v21 = vld [vmem:[%s0 + $0x8] sm:$0xf]
  %v22 = vld [vmem:[%s0 + $0xc] sm:$0xf]
  %v23 = vld [vmem:[%s0 + $0x10] sm:$0xf]
  %v24 = vld [vmem:[%s0 + $0x14] sm:$0xf]
  %v25 = vld [vmem:[%s0 + $0x18] sm:$0xf]
  %v26 = vld [vmem:[%s0 + $0x1c] sm:$0xf]
  %v27 = vld [vmem:[%s0 + $0x20] sm:$0xf]
  %v28 = vld [vmem:[%s0 + $0x24] sm:$0xf]
  %v29 = vld [vmem:[%s3] sm:$0xf]
  %v30 = vld [vmem:[%s2] sm:$0xf]
  %vm31 = vcmask 64512
  %v33 = vsel %vm31, %v29, 0
  %vm35 = vcmask 1043456
  %v37 = vsel %vm35, %v30, 0
  %39 = vmatpush.bf16.msra.mxu0 0
  %40 = vmatpush.bf16.msra.mxu0 0
  %41 = vmatpush.bf16.msra.mxu0 0
  %42 = vmatpush.bf16.msra.mxu0 0
  %43 = vmatpush.bf16.msra.mxu0 0
  %44 = vmatpush.bf16.msra.mxu0 0
  %45 = vmatpush.bf16.msra.mxu0 0
  %46 = vmatpush.bf16.msra.mxu0 %v37
  %47 = vmatmul.bf16.gmra.mxu0 %v33
  %v48 = vpop.f32.mrf.mxu0
  %v49 = vadd.f32 0.0, %v48
  %v50 = vpop.f32.mrf.mxu0
  %51 = vdwg.mxu0
  %v62 = vunpack.c.l.b16 %v19
  %v63 = vunpack.c.l.b16 %v20
  %v64 = vunpack.c.l.b16 %v21
  %v65 = vunpack.c.l.b16 %v22
  %v66 = vunpack.c.l.b16 %v23
  %v67 = vunpack.c.l.b16 %v24
  %v68 = vunpack.c.l.b16 %v25
  %v69 = vunpack.c.l.b16 %v26
  %v70 = vunpack.c.l.b16 %v27
  %v71 = vunpack.c.l.b16 %v28
  %v72 = vpack.c.b16 %v63, %v62
  %v73 = vpack.c.b16 %v65, %v64
  %v74 = vpack.c.b16 %v67, %v66
  %v75 = vpack.c.b16 %v69, %v68
  %v76 = vpack.c.b16 %v71, %v70
  %vm82 = vcmask 654336
  %v84 = vsel %vm82, %v18, 0
  %86 = vmatpush.bf16.msra.mxu0 0
  %87 = vmatpush.bf16.msra.mxu0 0
  %88 = vmatpush.bf16.msra.mxu0 0
  %89 = vmatpush.bf16.msra.mxu0 %v76
  %90 = vmatpush.bf16.msra.mxu0 %v75
  %91 = vmatpush.bf16.msra.mxu0 %v74
  %92 = vmatpush.bf16.msra.mxu0 %v73
  %93 = vmatpush.bf16.msra.mxu0 %v72
  %94 = vmatmul.bf16.gmra.mxu0 %v84
  %v95 = vpop.f32.mrf.mxu0
  %v96 = vadd.f32 %v49, %v95
  %v97 = vpop.f32.mrf.mxu0
  %98 = vdwg.mxu0
  %v99 = vmax.f32 %v96, 0.0
  %v100 = vpack.c.bf16 %v99, %v99
  %101 = vst [vmem:[%s4] sm:$0xf] %v100
  // Predicated region
  $region18: #{_lambda_.7} parent=0 // pred_check
    _
  $region19: #{_lambda_.7} parent=0 // pred_check_branch
    %103 = sbr.rel (0) target = $region21
  $region20: #{_lambda_.7} parent=0 // pred_region
    _
  $region21: #{_lambda_.7} parent=0 // pred_fallthru
    _
  // Predicated region
  $region22: #{_lambda_.7} parent=0 // pred_check
    _
  $region23: #{_lambda_.7} parent=0 // pred_check_branch
    %105 = sbr.rel (0) target = $region25
  $region24: #{_lambda_.7} parent=0 // pred_region
    _
  $region25: #{_lambda_.7} parent=0 // pred_fallthru
    _

// kernel: _lambda_.10
$region0: #{_lambda_.10}
  #allocation0 [shape = 'u32[]', space=smem, size = 0x4, offset = 0x4, fixed_abs, tag = 'smem constant byte address 0x4 - core index']
  #allocation1 [shape = 'u32[72,128]{1,0:T(1,128)}', space=vmem, size = 0x9000, scoped, tag = 'internal scratch']
  %s0 = inlined_call_operand.vmem [shape: bf16[16,128], index: 0, kind: input, shape index: {}]
  %s1 = inlined_call_operand.vmem [shape: bf16[72,16], index: 1, kind: input, shape index: {}]
  %s2 = inlined_call_operand.vmem [shape: f32[72,128], index: 2, kind: output, shape index: {}]
  %s3 = sld [smem:[#allocation0]]
  $region18: #{_lambda_.10} parent=0
    _
  %s5 = ssub.s32 1, %s3
  %s6 = scalar_select 0, %s5, %s3
  // Predicated region
  $region2: #{_lambda_.10} parent=0 // pred_check
    _
  $region3: #{_lambda_.10} parent=0 // pred_check_branch
    %8 = sbr.rel (0) target = $region5
  $region4: #{_lambda_.10} parent=0 // pred_region
    _
  $region5: #{_lambda_.10} parent=0 // pred_fallthru
    _
  // Predicated region
  $region6: #{_lambda_.10} parent=0 // pred_check
    _
  $region7: #{_lambda_.10} parent=0 // pred_check_branch
    %10 = sbr.rel (0) target = $region9
  $region8: #{_lambda_.10} parent=0 // pred_region
    _
  $region9: #{_lambda_.10} parent=0 // pred_fallthru
    _
  %v12 = vld [vmem:[%s1] sm:$0xf]
  %v13 = vld [vmem:[%s1 + $0x4] sm:$0xf]
  %v14 = vld [vmem:[%s1 + $0x8] sm:$0xf]
  %v15 = vld [vmem:[%s1 + $0xc] sm:$0xf]
  %v16 = vld [vmem:[%s1 + $0x10] sm:$0xf]
  %v17 = vld [vmem:[%s1 + $0x14] sm:$0xf]
  %v18 = vld [vmem:[%s1 + $0x18] sm:$0xf]
  %v19 = vld [vmem:[%s1 + $0x1c] sm:$0xf]
  %v20 = vld [vmem:[%s1 + $0x20] sm:$0xf]
  %v21 = vld [vmem:[%s0] sm:$0xf]
  %v22 = vld [vmem:[%s0 + $0x4] sm:$0xf]
  %v32 = vunpack.c.l.b16 %v12
  %v33 = vunpack.c.l.b16 %v13
  %v34 = vunpack.c.l.b16 %v14
  %v35 = vunpack.c.l.b16 %v15
  %v36 = vunpack.c.l.b16 %v16
  %v37 = vunpack.c.l.b16 %v17
  %v38 = vunpack.c.l.b16 %v18
  %v39 = vunpack.c.l.b16 %v19
  %v40 = vunpack.c.l.b16 %v20
  %v41 = vpack.c.b16 %v33, %v32
  %v42 = vpack.c.b16 %v35, %v34
  %v43 = vpack.c.b16 %v37, %v36
  %v44 = vpack.c.b16 %v39, %v38
  %v45 = vpack.c.b16 %v40, %v40
  %v48 = vunpack.c.l.b16 %v21
  %v49 = vunpack.c.l.b16 %v22
  %v50 = vpack.c.b16 %v49, %v48
  %vm52 = vcmask 130048
  %v54 = vsel %vm52, %v41, 0
  %v57 = vsel %vm52, %v42, 0
  %v60 = vsel %vm52, %v43, 0
  %v63 = vsel %vm52, %v44, 0
  %v66 = vsel %vm52, %v45, 0
  %68 = vmatpush.bf16.msra.mxu0 0
  %69 = vmatpush.bf16.msra.mxu0 0
  %70 = vmatpush.bf16.msra.mxu0 0
  %71 = vmatpush.bf16.msra.mxu0 0
  %72 = vmatpush.bf16.msra.mxu0 0
  %73 = vmatpush.bf16.msra.mxu0 0
  %74 = vmatpush.bf16.msra.mxu0 0
  %75 = vmatpush.bf16.msra.mxu0 %v50
  %76 = vmatmul.bf16.gmra.mxu0 %v54
  %v77 = vpop.f32.mrf.mxu0
  %v78 = vadd.f32 0.0, %v77
  %v79 = vpop.f32.mrf.mxu0
  %v80 = vadd.f32 0.0, %v79
  %81 = vmatmul.bf16.gmra.mxu0 %v57
  %v82 = vpop.f32.mrf.mxu0
  %v83 = vadd.f32 0.0, %v82
  %v84 = vpop.f32.mrf.mxu0
  %v85 = vadd.f32 0.0, %v84
  %86 = vmatmul.bf16.gmra.mxu0 %v60
  %v87 = vpop.f32.mrf.mxu0
  %v88 = vadd.f32 0.0, %v87
  %v89 = vpop.f32.mrf.mxu0
  %v90 = vadd.f32 0.0, %v89
  %91 = vmatmul.bf16.gmra.mxu0 %v63
  %v92 = vpop.f32.mrf.mxu0
  %v93 = vadd.f32 0.0, %v92
  %v94 = vpop.f32.mrf.mxu0
  %v95 = vadd.f32 0.0, %v94
  %96 = vmatmul.bf16.gmra.mxu0 %v66
  %v97 = vpop.f32.mrf.mxu0
  %v98 = vadd.f32 0.0, %v97
  %v99 = vpop.f32.mrf.mxu0
  %100 = vdwg.mxu0
  %101 = vst [vmem:[%s2] sm:$0xff] %v78
  %102 = vst [vmem:[%s2 + $0x8] sm:$0xff] %v80
  %103 = vst [vmem:[%s2 + $0x10] sm:$0xff] %v83
  %104 = vst [vmem:[%s2 + $0x18] sm:$0xff] %v85
  %105 = vst [vmem:[%s2 + $0x20] sm:$0xff] %v88
  %106 = vst [vmem:[%s2 + $0x28] sm:$0xff] %v90
  %107 = vst [vmem:[%s2 + $0x30] sm:$0xff] %v93
  %108 = vst [vmem:[%s2 + $0x38] sm:$0xff] %v95
  %109 = vst [vmem:[%s2 + $0x40] sm:$0xff] %v98
  // Predicated region
  $region10: #{_lambda_.10} parent=0 // pred_check
    _
  $region11: #{_lambda_.10} parent=0 // pred_check_branch
    %111 = sbr.rel (0) target = $region13
  $region12: #{_lambda_.10} parent=0 // pred_region
    _
  $region13: #{_lambda_.10} parent=0 // pred_fallthru
    _
  // Predicated region
  $region14: #{_lambda_.10} parent=0 // pred_check
    _
  $region15: #{_lambda_.10} parent=0 // pred_check_branch
    %113 = sbr.rel (0) target = $region17
  $region16: #{_lambda_.10} parent=0 // pred_region
    _
  $region17: #{_lambda_.10} parent=0 // pred_fallthru
    _

// kernel: _lambda_.9
$region0: #{_lambda_.9}
  #allocation0 [shape = 'u32[]', space=smem, size = 0x4, offset = 0x4, fixed_abs, tag = 'smem constant byte address 0x4 - core index']
  #allocation1 [shape = 'u32[72,128]{1,0:T(1,128)}', space=vmem, size = 0x9000, scoped, tag = 'internal scratch']
  %s0 = inlined_call_operand.vmem [shape: bf16[152,128], index: 0, kind: input, shape index: {}]
  %s1 = inlined_call_operand.vmem [shape: bf16[16,152], index: 1, kind: input, shape index: {}]
  %s2 = inlined_call_operand.vmem [shape: bf16[8,128], index: 2, kind: input, shape index: {}]
  %s3 = inlined_call_operand.vmem [shape: bf16[16,8], index: 3, kind: input, shape index: {}]
  %s4 = inlined_call_operand.vmem [shape: bf16[16,128], index: 4, kind: output, shape index: {}]
  %s5 = sld [smem:[#allocation0]]
  $region26: #{_lambda_.9} parent=0
    _
  %s7 = ssub.s32 1, %s5
  %s8 = scalar_select 0, %s7, %s5
  // Predicated region
  $region2: #{_lambda_.9} parent=0 // pred_check
    _
  $region3: #{_lambda_.9} parent=0 // pred_check_branch
    %10 = sbr.rel (0) target = $region5
  $region4: #{_lambda_.9} parent=0 // pred_region
    _
  $region5: #{_lambda_.9} parent=0 // pred_fallthru
    _
  // Predicated region
  $region6: #{_lambda_.9} parent=0 // pred_check
    _
  $region7: #{_lambda_.9} parent=0 // pred_check_branch
    %12 = sbr.rel (0) target = $region9
  $region8: #{_lambda_.9} parent=0 // pred_region
    _
  $region9: #{_lambda_.9} parent=0 // pred_fallthru
    _
  // Predicated region
  $region10: #{_lambda_.9} parent=0 // pred_check
    _
  $region11: #{_lambda_.9} parent=0 // pred_check_branch
    %14 = sbr.rel (0) target = $region13
  $region12: #{_lambda_.9} parent=0 // pred_region
    _
  $region13: #{_lambda_.9} parent=0 // pred_fallthru
    _
  // Predicated region
  $region14: #{_lambda_.9} parent=0 // pred_check
    _
  $region15: #{_lambda_.9} parent=0 // pred_check_branch
    %16 = sbr.rel (0) target = $region17
  $region16: #{_lambda_.9} parent=0 // pred_region
    _
  $region17: #{_lambda_.9} parent=0 // pred_fallthru
    _
  %v18 = vld [vmem:[%s1] sm:$0xff]
  %v19 = vld [vmem:[%s1 + $0x8] sm:$0xff]
  %v20 = vld [vmem:[%s0] sm:$0xf]
  %v21 = vld [vmem:[%s0 + $0x4] sm:$0xf]
  %v22 = vld [vmem:[%s0 + $0x8] sm:$0xf]
  %v23 = vld [vmem:[%s0 + $0xc] sm:$0xf]
  %v24 = vld [vmem:[%s0 + $0x10] sm:$0xf]
  %v25 = vld [vmem:[%s0 + $0x14] sm:$0xf]
  %v26 = vld [vmem:[%s0 + $0x18] sm:$0xf]
  %v27 = vld [vmem:[%s0 + $0x1c] sm:$0xf]
  %v28 = vld [vmem:[%s0 + $0x20] sm:$0xf]
  %v29 = vld [vmem:[%s0 + $0x24] sm:$0xf]
  %v30 = vld [vmem:[%s0 + $0x28] sm:$0xf]
  %v31 = vld [vmem:[%s0 + $0x2c] sm:$0xf]
  %v32 = vld [vmem:[%s0 + $0x30] sm:$0xf]
  %v33 = vld [vmem:[%s0 + $0x34] sm:$0xf]
  %v34 = vld [vmem:[%s0 + $0x38] sm:$0xf]
  %v35 = vld [vmem:[%s0 + $0x3c] sm:$0xf]
  %v36 = vld [vmem:[%s0 + $0x40] sm:$0xf]
  %v37 = vld [vmem:[%s0 + $0x44] sm:$0xf]
  %v38 = vld [vmem:[%s0 + $0x48] sm:$0xf]
  %v39 = vld [vmem:[%s3] sm:$0xf]
  %v40 = vld [vmem:[%s3 + $0x4] sm:$0xf]
  %v41 = vld [vmem:[%s2] sm:$0xf]
  %v44 = vunpack.c.l.b16 %v39
  %v45 = vunpack.c.l.b16 %v40
  %v46 = vpack.c.b16 %v45, %v44
  %vm47 = vcmask 64512
  %v49 = vsel %vm47, %v46, 0
  %vm51 = vcmask 1043456
  %v53 = vsel %vm51, %v41, 0
  %55 = vmatpush.bf16.msra.mxu0 0
  %56 = vmatpush.bf16.msra.mxu0 0
  %57 = vmatpush.bf16.msra.mxu0 0
  %58 = vmatpush.bf16.msra.mxu0 0
  %59 = vmatpush.bf16.msra.mxu0 0
  %60 = vmatpush.bf16.msra.mxu0 0
  %61 = vmatpush.bf16.msra.mxu0 0
  %62 = vmatpush.bf16.msra.mxu0 %v53
  %63 = vmatmul.bf16.gmra.mxu0 %v49
  %v64 = vpop.f32.mrf.mxu0
  %v65 = vadd.f32 0.0, %v64
  %v66 = vpop.f32.mrf.mxu0
  %v67 = vadd.f32 0.0, %v66
  %68 = vdwg.mxu0
  %v71 = vunpack.c.l.b16 %v18
  %v72 = vunpack.c.h.b16 %v18
  %v73 = vunpack.c.l.b16 %v19
  %v74 = vunpack.c.h.b16 %v19
  %v75 = vpack.c.b16 %v73, %v71
  %v76 = vpack.c.b16 %v74, %v72
  %v97 = vunpack.c.l.b16 %v20
  %v98 = vunpack.c.l.b16 %v21
  %v99 = vunpack.c.l.b16 %v22
  %v100 = vunpack.c.l.b16 %v23
  %v101 = vunpack.c.l.b16 %v24
  %v102 = vunpack.c.l.b16 %v25
  %v103 = vunpack.c.l.b16 %v26
  %v104 = vunpack.c.l.b16 %v27
  %v105 = vunpack.c.l.b16 %v28
  %v106 = vunpack.c.l.b16 %v29
  %v107 = vunpack.c.l.b16 %v30
  %v108 = vunpack.c.l.b16 %v31
  %v109 = vunpack.c.l.b16 %v32
  %v110 = vunpack.c.l.b16 %v33
  %v111 = vunpack.c.l.b16 %v34
  %v112 = vunpack.c.l.b16 %v35
  %v113 = vunpack.c.l.b16 %v36
  %v114 = vunpack.c.l.b16 %v37
  %v115 = vunpack.c.l.b16 %v38
  %v116 = vpack.c.b16 %v98, %v97
  %v117 = vpack.c.b16 %v100, %v99
  %v118 = vpack.c.b16 %v102, %v101
  %v119 = vpack.c.b16 %v104, %v103
  %v120 = vpack.c.b16 %v106, %v105
  %v121 = vpack.c.b16 %v108, %v107
  %v122 = vpack.c.b16 %v110, %v109
  %v123 = vpack.c.b16 %v112, %v111
  %v124 = vpack.c.b16 %v114, %v113
  %v125 = vpack.c.b16 %v115, %v115
  %vm135 = vcmask 195584
  %v137 = vsel %vm135, %v76, 0
  %v140 = vsel %vm51, %v125, 0
  %142 = vmatpush.bf16.msra.mxu0 %v123
  %143 = vmatpush.bf16.msra.mxu0 %v122
  %144 = vmatpush.bf16.msra.mxu0 %v121
  %145 = vmatpush.bf16.msra.mxu0 %v120
  %146 = vmatpush.bf16.msra.mxu0 %v119
  %147 = vmatpush.bf16.msra.mxu0 %v118
  %148 = vmatpush.bf16.msra.mxu0 %v117
  %149 = vmatpush.bf16.msra.mxu0 %v116
  %150 = vmatmul.bf16.gmra.mxu0 %v75
  %v151 = vpop.f32.mrf.mxu0
  %v152 = vadd.f32 %v65, %v151
  %v153 = vpop.f32.mrf.mxu0
  %v154 = vadd.f32 %v67, %v153
  %155 = vdwg.mxu0
  %156 = vmatpush.bf16.msra.mxu0 0
  %157 = vmatpush.bf16.msra.mxu0 0
  %158 = vmatpush.bf16.msra.mxu0 0
  %159 = vmatpush.bf16.msra.mxu0 0
  %160 = vmatpush.bf16.msra.mxu0 0
  %161 = vmatpush.bf16.msra.mxu0 0
  %162 = vmatpush.bf16.msra.mxu0 %v140
  %163 = vmatpush.bf16.msra.mxu0 %v124
  %164 = vmatmul.bf16.gmra.mxu0 %v137
  %v165 = vpop.f32.mrf.mxu0
  %v166 = vadd.f32 %v152, %v165
  %v167 = vpop.f32.mrf.mxu0
  %v168 = vadd.f32 %v154, %v167
  %169 = vdwg.mxu0
  %v170 = vmax.f32 %v166, 0.0
  %v171 = vmax.f32 %v168, 0.0
  %v172 = vpack.c.bf16 %v170, %v170
  %v173 = vpack.c.bf16 %v171, %v171
  %174 = vst [vmem:[%s4] sm:$0xf] %v172
  %175 = vst [vmem:[%s4 + $0x4] sm:$0xf] %v173
  // Predicated region
  $region18: #{_lambda_.9} parent=0 // pred_check
    _
  $region19: #{_lambda_.9} parent=0 // pred_check_branch
    %177 = sbr.rel (0) target = $region21
  $region20: #{_lambda_.9} parent=0 // pred_region
    _
  $region21: #{_lambda_.9} parent=0 // pred_fallthru
    _
  // Predicated region
  $region22: #{_lambda_.9} parent=0 // pred_check
    _
  $region23: #{_lambda_.9} parent=0 // pred_check_branch
    %179 = sbr.rel (0) target = $region25
  $region24: #{_lambda_.9} parent=0 // pred_region
    _
  $region25: #{_lambda_.9} parent=0 // pred_fallthru
    _

// kernel: _lambda_.11
$region0: #{_lambda_.11}
  #allocation0 [shape = 'u32[]', space=smem, size = 0x4, offset = 0x4, fixed_abs, tag = 'smem constant byte address 0x4 - core index']
  #allocation1 [shape = 'u32[72,128]{1,0:T(1,128)}', space=vmem, size = 0x9000, scoped, tag = 'internal scratch']
  %s0 = inlined_call_operand.vmem [shape: bf16[8,128], index: 0, kind: input, shape index: {}]
  %s1 = inlined_call_operand.vmem [shape: bf16[36,8], index: 1, kind: input, shape index: {}]
  %s2 = inlined_call_operand.vmem [shape: f32[36,128], index: 2, kind: output, shape index: {}]
  %s3 = sld [smem:[#allocation0]]
  $region18: #{_lambda_.11} parent=0
    _
  %s5 = ssub.s32 1, %s3
  %s6 = scalar_select 0, %s5, %s3
  // Predicated region
  $region2: #{_lambda_.11} parent=0 // pred_check
    _
  $region3: #{_lambda_.11} parent=0 // pred_check_branch
    %8 = sbr.rel (0) target = $region5
  $region4: #{_lambda_.11} parent=0 // pred_region
    _
  $region5: #{_lambda_.11} parent=0 // pred_fallthru
    _
  // Predicated region
  $region6: #{_lambda_.11} parent=0 // pred_check
    _
  $region7: #{_lambda_.11} parent=0 // pred_check_branch
    %10 = sbr.rel (0) target = $region9
  $region8: #{_lambda_.11} parent=0 // pred_region
    _
  $region9: #{_lambda_.11} parent=0 // pred_fallthru
    _
  %v12 = vld [vmem:[%s1] sm:$0xf]
  %v13 = vld [vmem:[%s1 + $0x4] sm:$0xf]
  %v14 = vld [vmem:[%s1 + $0x8] sm:$0xf]
  %v15 = vld [vmem:[%s1 + $0xc] sm:$0xf]
  %v16 = vld [vmem:[%s1 + $0x10] sm:$0x3]
  %v17 = vld [vmem:[%s0] sm:$0xf]
  %v23 = vunpack.c.l.b16 %v12
  %v24 = vunpack.c.l.b16 %v13
  %v25 = vunpack.c.l.b16 %v14
  %v26 = vunpack.c.l.b16 %v15
  %v27 = vunpack.c.l.b16 %v16
  %v28 = vpack.c.b16 %v24, %v23
  %v29 = vpack.c.b16 %v26, %v25
  %v30 = vpack.c.b16 %v27, %v27
  %vm31 = vcmask 64512
  %v33 = vsel %vm31, %v28, 0
  %v36 = vsel %vm31, %v29, 0
  %v39 = vsel %vm31, %v30, 0
  %vm41 = vcmask 1043456
  %v43 = vsel %vm41, %v17, 0
  %45 = vmatpush.bf16.msra.mxu0 0
  %46 = vmatpush.bf16.msra.mxu0 0
  %47 = vmatpush.bf16.msra.mxu0 0
  %48 = vmatpush.bf16.msra.mxu0 0
  %49 = vmatpush.bf16.msra.mxu0 0
  %50 = vmatpush.bf16.msra.mxu0 0
  %51 = vmatpush.bf16.msra.mxu0 0
  %52 = vmatpush.bf16.msra.mxu0 %v43
  %53 = vmatmul.bf16.gmra.mxu0 %v33
  %v54 = vpop.f32.mrf.mxu0
  %v55 = vadd.f32 0.0, %v54
  %v56 = vpop.f32.mrf.mxu0
  %v57 = vadd.f32 0.0, %v56
  %58 = vmatmul.bf16.gmra.mxu0 %v36
  %v59 = vpop.f32.mrf.mxu0
  %v60 = vadd.f32 0.0, %v59
  %v61 = vpop.f32.mrf.mxu0
  %v62 = vadd.f32 0.0, %v61
  %63 = vmatmul.bf16.gmra.mxu0 %v39
  %v64 = vpop.f32.mrf.mxu0
  %v65 = vadd.f32 0.0, %v64
  %v66 = vpop.f32.mrf.mxu0
  %67 = vdwg.mxu0
  %68 = vst [vmem:[%s2] sm:$0xff] %v55
  %69 = vst [vmem:[%s2 + $0x8] sm:$0xff] %v57
  %70 = vst [vmem:[%s2 + $0x10] sm:$0xff] %v60
  %71 = vst [vmem:[%s2 + $0x18] sm:$0xff] %v62
  %72 = vst [vmem:[%s2 + $0x20] sm:$0xf] %v65
  // Predicated region
  $region10: #{_lambda_.11} parent=0 // pred_check
    _
  $region11: #{_lambda_.11} parent=0 // pred_check_branch
    %74 = sbr.rel (0) target = $region13
  $region12: #{_lambda_.11} parent=0 // pred_region
    _
  $region13: #{_lambda_.11} parent=0 // pred_fallthru
    _
  // Predicated region
  $region14: #{_lambda_.11} parent=0 // pred_check
    _
  $region15: #{_lambda_.11} parent=0 // pred_check_branch
    %76 = sbr.rel (0) target = $region17
  $region16: #{_lambda_.11} parent=0 // pred_region
    _
  $region17: #{_lambda_.11} parent=0 // pred_fallthru
    _

</llo_original>
